<compile_context>
chip_gen: v6e
topology: v6e:2x2x1
jax: 0.10.0
libtpu: 0.0.40
codegen_flags: <defaults>
</compile_context>

<pallas_src>
import functools

import jax
import jax.numpy as jnp
from jax import lax
from jax.experimental import pallas as pl
from jax.experimental.pallas import tpu as pltpu

LANES = 128
SUBLANES = 8
TARGET_BLOCK_ROWS = 1024  # (1024, 128) f32 block = 512 KiB per input; 2 in x 2 bufs = 2 MiB


def _vfl_kernel(pred_ref, true_ref, out_ref, *, gamma, alpha, block_rows,
                total_elems, needs_mask):
    x = pred_ref[...].astype(jnp.float32)
    y = true_ref[...].astype(jnp.float32)

    # One exp reused for both BCE-with-logits and sigmoid.
    e = jnp.exp(-jnp.abs(x))                              # EUP: exp
    # BCE with logits, reduction='none': max(x,0) - x*y + log1p(exp(-|x|))
    bce = jnp.maximum(x, 0.0) - x * y + jnp.log1p(e)      # EUP: log
    inv = pl.reciprocal(1.0 + e, approx=False)            # EUP: rcp
    pred_prob = jnp.where(x >= 0.0, inv, e * inv)         # sigmoid(x)

    t = jnp.abs(pred_prob - y)
    if gamma == 1.5:
        w = t * jnp.sqrt(t)                               # |p - y|^1.5 without jnp.power
    else:
        w = jnp.power(t, gamma)

    focal_weight = jnp.where(y > 0.0, y, alpha * w)
    loss = bce * focal_weight

    if needs_mask:
        i = pl.program_id(0)
        row = lax.broadcasted_iota(jnp.int32, (block_rows, LANES), 0) + i * block_rows
        col = lax.broadcasted_iota(jnp.int32, (block_rows, LANES), 1)
        idx = row * LANES + col
        loss = jnp.where(idx < total_elems, loss, 0.0)

    # Per-block partial sum collapsed onto a single (8,128) vreg via full-width VPU adds.
    partial = loss.reshape(block_rows // SUBLANES, SUBLANES, LANES).sum(axis=0)
    out_ref[...] = partial.reshape(1, SUBLANES, LANES)


def vf_loss(pred, true, gamma=1.5, alpha=0.25):
    """Varifocal-weighted BCEWithLogits loss with 'mean' reduction (scalar output)."""
    assert pred.shape == true.shape
    total = int(pred.size)
    itemsize = jnp.dtype(pred.dtype).itemsize

    # Sublane alignment: 8 rows for 32-bit dtypes, 16 for 16-bit packed dtypes (bf16).
    sub_align = 8 if itemsize >= 4 else 16

    rows = -(-total // LANES)
    block_rows = min(TARGET_BLOCK_ROWS, ((rows + sub_align - 1) // sub_align) * sub_align)
    rows_padded = ((rows + block_rows - 1) // block_rows) * block_rows
    padded_total = rows_padded * LANES
    needs_mask = padded_total != total

    flat_pred = pred.reshape(-1)
    flat_true = true.reshape(-1)
    if needs_mask:
        pad = padded_total - total
        flat_pred = jnp.pad(flat_pred, (0, pad))
        flat_true = jnp.pad(flat_true, (0, pad))

    pred2d = flat_pred.reshape(rows_padded, LANES)
    true2d = flat_true.reshape(rows_padded, LANES)

    grid = (rows_padded // block_rows,)

    kernel = functools.partial(
        _vfl_kernel,
        gamma=float(gamma),
        alpha=float(alpha),
        block_rows=block_rows,
        total_elems=total,
        needs_mask=needs_mask,
    )

    cost = pl.CostEstimate(
        flops=12 * total,
        transcendentals=4 * total,  # exp, log1p, rcp, sqrt per element
        bytes_accessed=2 * padded_total * itemsize + grid[0] * SUBLANES * LANES * 4,
    )

    partials = pl.pallas_call(
        kernel,
        out_shape=jax.ShapeDtypeStruct((grid[0], SUBLANES, LANES), jnp.float32),
        grid_spec=pltpu.PrefetchScalarGridSpec(
            num_scalar_prefetch=0,
            grid=grid,
            in_specs=[
                pl.BlockSpec((block_rows, LANES), lambda i: (i, 0)),
                pl.BlockSpec((block_rows, LANES), lambda i: (i, 0)),
            ],
            out_specs=pl.BlockSpec((1, SUBLANES, LANES), lambda i: (i, 0, 0)),
        ),
        compiler_params=pltpu.CompilerParams(
            # Blocks are independent (per-block partial sums) -> shard across TCs on v7x.
            dimension_semantics=("parallel",),
        ),
        cost_estimate=cost,
    )(pred2d, true2d)

    # reduction == 'mean': one cheap cross-lane reduce in XLA, divide by the TRUE count.
    return jnp.sum(partials) / jnp.float32(total)


def _vf_loss_ref(pred, true, gamma=1.5, alpha=0.25):
    """Pure-JAX reference mirroring the PyTorch module."""
    x = pred.astype(jnp.float32)
    y = true.astype(jnp.float32)
    bce = jnp.maximum(x, 0.0) - x * y + jnp.log1p(jnp.exp(-jnp.abs(x)))
    p = jax.nn.sigmoid(x)
    fw = y * (y > 0.0) + alpha * jnp.power(jnp.abs(p - y), gamma) * (y <= 0.0)
    return jnp.mean(bce * fw)


if __name__ == "__main__":
    # Small detection-like shapes: batch=2, channels(classes)=4, spatial=16x16 (NCHW).
    key = jax.random.PRNGKey(0)
    k1, k2 = jax.random.split(key)
    B, C, H, W = 2, 4, 16, 16
    pred = jax.random.normal(k1, (B, C, H, W), dtype=jnp.float32)  # logits
    # Targets: mostly zeros with some positive soft labels (IoU-quality style).
    true = jnp.where(
        jax.random.uniform(k2, (B, C, H, W)) > 0.8,
        jax.random.uniform(jax.random.fold_in(k2, 1), (B, C, H, W)),
        0.0,
    ).astype(jnp.float32)

    out = vf_loss(pred, true)
    out = jax.block_until_ready(out)

    ref = _vf_loss_ref(pred, true)
    assert jnp.allclose(out, ref, rtol=1e-5, atol=1e-6), (out, ref)

    print("KERNEL_OK")
</pallas_src>

<mosaic_0001>
module attributes {stable_mosaic.version = 11 : i64} {
  func.func @_vfl_kernel(%arg0: i32, %arg1: memref<16x128xf32, #tpu.memory_space<vmem>>, %arg2: memref<16x128xf32, #tpu.memory_space<vmem>>, %arg3: memref<1x8x128xf32, #tpu.memory_space<vmem>>) attributes {dimension_semantics = [#tpu.dimension_semantics<parallel>], iteration_bounds = array<i64: 1>, scalar_prefetch = 0 : i64, scratch_operands = 0 : i64, tpu.core_type = #tpu.core_type<tc>, window_params = [{transform_indices = @transform_0, window_bounds = array<i64: 16, 128>}, {transform_indices = @transform_1, window_bounds = array<i64: 16, 128>}, {transform_indices = @transform_2, window_bounds = array<i64: 1, 8, 128>}]} {
    %c0 = arith.constant 0 : index
    %c0_0 = arith.constant 0 : index
    %0 = vector.load %arg1[%c0, %c0_0] : memref<16x128xf32, #tpu.memory_space<vmem>>, vector<16x128xf32>
    %c0_1 = arith.constant 0 : index
    %c0_2 = arith.constant 0 : index
    %1 = vector.load %arg2[%c0_1, %c0_2] : memref<16x128xf32, #tpu.memory_space<vmem>>, vector<16x128xf32>
    %2 = math.absf %0 : vector<16x128xf32>
    %cst = arith.constant 0.000000e+00 : f32
    %3 = vector.broadcast %cst : f32 to vector<16x128xf32>
    %4 = arith.subf %3, %2 : vector<16x128xf32>
    %5 = math.exp %4 : vector<16x128xf32>
    %cst_3 = arith.constant 0.000000e+00 : f32
    %6 = vector.broadcast %cst_3 : f32 to vector<16x128xf32>
    %7 = arith.maximumf %0, %6 : vector<16x128xf32>
    %8 = arith.mulf %0, %1 : vector<16x128xf32>
    %9 = arith.subf %7, %8 : vector<16x128xf32>
    %10 = math.log1p %5 : vector<16x128xf32>
    %11 = arith.addf %9, %10 : vector<16x128xf32>
    %cst_4 = arith.constant 1.000000e+00 : f32
    %12 = vector.broadcast %cst_4 : f32 to vector<16x128xf32>
    %13 = arith.addf %12, %5 : vector<16x128xf32>
    %14 = tpu.reciprocal %13 : vector<16x128xf32> -> vector<16x128xf32>
    %cst_5 = arith.constant 0.000000e+00 : f32
    %15 = vector.broadcast %cst_5 : f32 to vector<16x128xf32>
    %16 = arith.cmpf oge, %0, %15 : vector<16x128xf32>
    %17 = arith.mulf %5, %14 : vector<16x128xf32>
    %18 = arith.select %16, %14, %17 : vector<16x128xi1>, vector<16x128xf32>
    %19 = arith.subf %18, %1 : vector<16x128xf32>
    %20 = math.absf %19 : vector<16x128xf32>
    %21 = math.sqrt %20 : vector<16x128xf32>
    %22 = arith.mulf %20, %21 : vector<16x128xf32>
    %cst_6 = arith.constant 0.000000e+00 : f32
    %23 = vector.broadcast %cst_6 : f32 to vector<16x128xf32>
    %24 = arith.cmpf ogt, %1, %23 : vector<16x128xf32>
    %cst_7 = arith.constant 2.500000e-01 : f32
    %25 = vector.broadcast %cst_7 : f32 to vector<16x128xf32>
    %26 = arith.mulf %25, %22 : vector<16x128xf32>
    %27 = arith.select %24, %1, %26 : vector<16x128xi1>, vector<16x128xf32>
    %28 = arith.mulf %11, %27 : vector<16x128xf32>
    %29 = vector.shape_cast %28 : vector<16x128xf32> to vector<2x8x128xf32>
    %cst_8 = arith.constant dense<0.000000e+00> : vector<8x128xf32>
    %30 = vector.multi_reduction <add>, %29, %cst_8 [0] : vector<2x8x128xf32> to vector<8x128xf32>
    %31 = vector.shape_cast %30 : vector<8x128xf32> to vector<1x8x128xf32>
    %c0_9 = arith.constant 0 : index
    %c0_10 = arith.constant 0 : index
    %c0_11 = arith.constant 0 : index
    %32 = vector.load %arg3[%c0_9, %c0_10, %c0_11] : memref<1x8x128xf32, #tpu.memory_space<vmem>>, vector<1x8x128xf32>
    tpu.vector_store %arg3[%c0_9, %c0_10, %c0_11], %31 {strides = array<i32>} : memref<1x8x128xf32, #tpu.memory_space<vmem>>, vector<1x8x128xf32>,
    return
  }
  func.func @transform_0(%arg0: i32) -> (i32, i32) {
    %c0_i32 = arith.constant 0 : i32
    %c0_i32_0 = arith.constant 0 : i32
    return %arg0, %c0_i32 : i32, i32
  }
  func.func @transform_1(%arg0: i32) -> (i32, i32) {
    %c0_i32 = arith.constant 0 : i32
    %c0_i32_0 = arith.constant 0 : i32
    return %arg0, %c0_i32 : i32, i32
  }
  func.func @transform_2(%arg0: i32) -> (i32, i32, i32) {
    %c0_i32 = arith.constant 0 : i32
    %c0_i32_0 = arith.constant 0 : i32
    %c0_i32_1 = arith.constant 0 : i32
    return %arg0, %c0_i32, %c0_i32_0 : i32, i32, i32
  }
}

</mosaic_0001>

<llo_original>
// kernel: tpu_custom_call.1
$region0: #{tpu_custom_call.1}
  #allocation0 [shape = 'u32[]', space=smem, size = 0x4, offset = 0x4, fixed_abs, tag = 'smem constant byte address 0x4 - core index']
  #allocation1 [shape = 'u32[144,128]{1,0:T(1,128)}', space=vmem, size = 0x12000, scoped, tag = 'internal scratch']
  %s0 = inlined_call_operand.hbm [shape: f32[16,128], index: 0, kind: input, shape index: {}]
  %s1 = inlined_call_operand.hbm [shape: f32[16,128], index: 1, kind: input, shape index: {}]
  %s2 = inlined_call_operand.hbm [shape: f32[1,8,128], index: 2, kind: output, shape index: {}]
  %s3 = sld [smem:[#allocation0]]
  $region26: #{tpu_custom_call.1} parent=0
    _
  %s5 = ssub.s32 1, %s3
  %s6 = scalar_select 0, %s5, %s3
  $region1: #{tpu_custom_call.1} parent=0
    #allocation2 [shape = 'u8[8192]{0}', space=vmem, size = 0x2000, scoped, tag = 'input window, operand 0, single buffered']
    #allocation3 [shape = 's32[1]{0}', space=sflag, size = 0x4, scoped, tag = 'scoped memory for tpu_custom_call.1']
    #allocation4 [shape = 's32[1]{0}', space=sflag, size = 0x4, scoped, tag = 'scoped memory for tpu_custom_call.1']
    #allocation5 [shape = 'u8[8192]{0}', space=vmem, size = 0x2000, scoped, tag = 'input window, operand 1, single buffered']
    #allocation6 [shape = 's32[1]{0}', space=sflag, size = 0x4, scoped, tag = 'scoped memory for tpu_custom_call.1']
    #allocation7 [shape = 'u8[4096]{0}', space=vmem, size = 0x1000, scoped, tag = 'output window, operand 0, single buffered']
    %7 = vsyncpa [#allocation3], 0
    %8 = vsyncpa [#allocation6], 0
    %9 = vsyncpa [#allocation4], 0
    // Predicated region
    $region2: #{tpu_custom_call.1} parent=1 // pred_check
      _
    $region3: #{tpu_custom_call.1} parent=1 // pred_check_branch
      %11 = sbr.rel (0) target = $region5
    $region4: #{tpu_custom_call.1} parent=1 // pred_region
      %s13 = ssub.s32 256, 256
      %14 = vsyncadd [#allocation3], %s13
      %s15 = sshll.u32 [#allocation2], 4
      %s16 = int_to_ptr.vmem [resolvable:$true] %s15
      %21 = dma.hbm_to_vmem [thread:$0]  %s0, 256, %s16, [#allocation3], 128, 128, 8
    $region5: #{tpu_custom_call.1} parent=1 // pred_fallthru
      _
    // Predicated region
    $region6: #{tpu_custom_call.1} parent=1 // pred_check
      _
    $region7: #{tpu_custom_call.1} parent=1 // pred_check_branch
      %23 = sbr.rel (0) target = $region9
    $region8: #{tpu_custom_call.1} parent=1 // pred_region
      %s25 = ssub.s32 256, 256
      %26 = vsyncadd [#allocation6], %s25
      %s27 = sshll.u32 [#allocation5], 4
      %s28 = int_to_ptr.vmem [resolvable:$true] %s27
      %33 = dma.hbm_to_vmem [thread:$0]  %s1, 256, %s28, [#allocation6], 128, 128, 8
    $region9: #{tpu_custom_call.1} parent=1 // pred_fallthru
      _
    // Predicated region
    $region10: #{tpu_custom_call.1} parent=1 // pred_check
      _
    $region11: #{tpu_custom_call.1} parent=1 // pred_check_branch
      %35 = sbr.rel (0) target = $region13
    $region12: #{tpu_custom_call.1} parent=1 // pred_region
      %36 = dma.done [#allocation3], 256
    $region13: #{tpu_custom_call.1} parent=1 // pred_fallthru
      _
    // Predicated region
    $region14: #{tpu_custom_call.1} parent=1 // pred_check
      _
    $region15: #{tpu_custom_call.1} parent=1 // pred_check_branch
      %38 = sbr.rel (0) target = $region17
    $region16: #{tpu_custom_call.1} parent=1 // pred_region
      %39 = dma.done [#allocation6], 256
    $region17: #{tpu_custom_call.1} parent=1 // pred_fallthru
      _
    %v40 = vld [vmem:[#allocation2] sm:$0xff]
    %v41 = vld [vmem:[#allocation2 + $0x8] sm:$0xff]
    %v42 = vld [vmem:[#allocation5] sm:$0xff]
    %v43 = vld [vmem:[#allocation5 + $0x8] sm:$0xff]
    %v44 = vand.u32 2147483647, %v40
    %v45 = vand.u32 2147483647, %v41
    %v46 = vsub.f32 0.0, %v44
    %v47 = vsub.f32 0.0, %v45
    %v48 = vmul.f32 %v46, 1.442695
    %v49 = vpow.pop %v48
    %v50 = vmul.f32 %v47, 1.442695
    %v51 = vpow.pop %v50
    %v52 = vmax.f32 %v40, 0.0
    %v53 = vmax.f32 %v41, 0.0
    %v54 = vmul.f32 %v40, %v42
    %v55 = vmul.f32 %v41, %v43
    %v56 = vsub.f32 %v52, %v54
    %v57 = vsub.f32 %v53, %v55
    %v58 = vadd.f32 %v49, 1.0
    %v59 = vlog2.pop %v58
    %v60 = vmul.f32 %v59, 0.6931472
    %v61 = vmul.f32 -0.5, %v49
    %v62 = vadd.f32 %v61, 1.0
    %v63 = vmul.f32 %v62, %v49
    %v64 = vand.u32 2147483647, %v49
    %vm65 = vcmp.lt.f32.partialorder %v64, 0.0004427343
    %v66 = vsel %vm65, %v63, %v60
    %v67 = vadd.f32 %v51, 1.0
    %v68 = vlog2.pop %v67
    %v69 = vmul.f32 %v68, 0.6931472
    %v70 = vmul.f32 -0.5, %v51
    %v71 = vadd.f32 %v70, 1.0
    %v72 = vmul.f32 %v71, %v51
    %v73 = vand.u32 2147483647, %v51
    %vm74 = vcmp.lt.f32.partialorder %v73, 0.0004427343
    %v75 = vsel %vm74, %v72, %v69
    %v76 = vadd.f32 %v56, %v66
    %v77 = vadd.f32 %v57, %v75
    %v78 = vadd.f32 %v49, 1.0
    %v79 = vadd.f32 %v51, 1.0
    %v80 = vrcp.pop %v78
    %v81 = vrcp.pop %v79
    %vm82 = vcmp.ge.f32.partialorder %v40, 0.0
    %vm83 = vcmp.ge.f32.partialorder %v41, 0.0
    %v84 = vmul.f32 %v49, %v80
    %v85 = vmul.f32 %v51, %v81
    %v86 = vsel %vm82, %v80, %v84
    %v87 = vsel %vm83, %v81, %v85
    %v88 = vsub.f32 %v86, %v42
    %v89 = vsub.f32 %v87, %v43
    %v90 = vand.u32 2147483647, %v88
    %v91 = vand.u32 2147483647, %v89
    %v92 = vrsqrt.pop %v90
    %v93 = vmul.f32 %v90, %v92
    %vm94 = vcmp.eq.f32.partialorder %v90, inf
    %v95 = vsel %vm94, %v90, %v93
    %vm96 = vcmp.eq.f32.partialorder %v90, 0.0
    %v97 = vand.u32 %v90, 2147483648
    %v98 = vsel %vm96, %v97, %v95
    %v99 = vrsqrt.pop %v91
    %v100 = vmul.f32 %v91, %v99
    %vm101 = vcmp.eq.f32.partialorder %v91, inf
    %v102 = vsel %vm101, %v91, %v100
    %vm103 = vcmp.eq.f32.partialorder %v91, 0.0
    %v104 = vand.u32 %v91, 2147483648
    %v105 = vsel %vm103, %v104, %v102
    %v106 = vmul.f32 %v90, %v98
    %v107 = vmul.f32 %v91, %v105
    %vm108 = vcmp.gt.f32.partialorder %v42, 0.0
    %vm109 = vcmp.gt.f32.partialorder %v43, 0.0
    %v110 = vmul.f32 %v106, 0.25
    %v111 = vmul.f32 %v107, 0.25
    %v112 = vsel %vm108, %v42, %v110
    %v113 = vsel %vm109, %v43, %v111
    %v114 = vmul.f32 %v76, %v112
    %v115 = vmul.f32 %v77, %v113
    %v116 = vadd.f32 %v114, %v115
    %117 = vst [vmem:[#allocation7] sm:$0xff] %v116
    // Predicated region
    $region18: #{tpu_custom_call.1} parent=1 // pred_check
      _
    $region19: #{tpu_custom_call.1} parent=1 // pred_check_branch
      %119 = sbr.rel (0) target = $region21
    $region20: #{tpu_custom_call.1} parent=1 // pred_region
      %s121 = ssub.s32 128, 128
      %122 = vsyncadd [#allocation4], %s121
      %s124 = sshll.u32 [#allocation7], 4
      %s125 = int_to_ptr.vmem [resolvable:$true] %s124
      %127 = dma.vmem_to_hbm [thread:$0]  %s125, 128, %s2, [#allocation4]
    $region21: #{tpu_custom_call.1} parent=1 // pred_fallthru
      _
    // Predicated region
    $region22: #{tpu_custom_call.1} parent=1 // pred_check
      _
    $region23: #{tpu_custom_call.1} parent=1 // pred_check_branch
      %129 = sbr.rel (0) target = $region25
    $region24: #{tpu_custom_call.1} parent=1 // pred_region
      %130 = dma.done [#allocation4], 128
    $region25: #{tpu_custom_call.1} parent=1 // pred_fallthru
      _
    %131 = vsyncpa [#allocation3], 1
    %132 = vsyncpa [#allocation6], 1
    %133 = vsyncpa [#allocation4], 1

</llo_original>
